<compile_context>
chip_gen: v7x
topology: tpu7x:2x2x1
jax: 0.10.0
libtpu: 0.0.40
codegen_flags: <defaults>
</compile_context>

<pallas_src>
import functools

import jax
import jax.numpy as jnp
from jax import lax
from jax.experimental import pallas as pl
from jax.experimental.pallas import tpu as pltpu


_TARGET_BLOCK_BYTES = 8 * 1024 * 1024   # combined in+out DMA traffic per grid step
_MIN_GRID_STEPS = 8                     # keep both v7x TensorCores busy
_VMEM_LIMIT_BYTES = 40 * 1024 * 1024    # headroom under v7x's 64 MiB physical VMEM


def _round_down(x, m):
    return (x // m) * m


def _normalize_pad_kernel(x_ref, const_ref, o_ref, *, H, W, W_pad, th, mask_rows):
    # x_ref     : (tr, th, W)      input plane-row tile (any dtype)
    # const_ref : (tr, 1, 2)       [..., 0] = 1/std, [..., 1] = -mean/std per plane
    # o_ref     : (tr, th, W_pad)  normalized (+ fused zero-pad-then-normalize) tile
    c = const_ref[...]
    inv = c[:, :, 0:1]     # (tr, 1, 1)
    bias = c[:, :, 1:2]    # (tr, 1, 1)  == (0 - mean) / std

    x = x_ref[...].astype(jnp.float32)
    y = x * inv + bias                      # one vmul + one vadd per vreg

    if mask_rows:
        # Rows >= H are bottom padding (or ragged overhang of the clamped input
        # block): the padded value is (0 - mean)/std == bias.
        row = pl.program_id(1) * th + lax.broadcasted_iota(jnp.int32, y.shape, 1)
        y = jnp.where(row < H, y, bias)

    o_ref[:, :, :W] = y.astype(o_ref.dtype)
    if W_pad > W:
        pad = jnp.broadcast_to(bias, (y.shape[0], y.shape[1], W_pad - W))
        o_ref[:, :, W:] = pad.astype(o_ref.dtype)


def caffe2_normalize_pad(images, pixel_mean, pixel_std, *,
                         size_divisibility=1, out_dtype=None):
    """Fused pad + (data - mean) / std with per-channel broadcast, NCHW layout.

    Output spatial dims are rounded up to `size_divisibility`; padded pixels get
    (0 - mean) / std, exactly as if the image had been zero-padded first and
    normalized second (ImageList semantics).
    """
    N, C, H, W = images.shape
    H_pad = H + (-H) % size_divisibility
    W_pad = W + (-W) % size_divisibility
    R = N * C

    in_dtype = images.dtype
    if out_dtype is None:
        out_dtype = jnp.float32 if jnp.issubdtype(in_dtype, jnp.integer) else in_dtype
    in_b = jnp.dtype(in_dtype).itemsize
    out_b = jnp.dtype(out_dtype).itemsize

    # TODO(synk): images with H < 8 would need a full-extent (non-8-aligned)
    # sublane block; not needed for detectron2-sized inputs.
    assert H >= 8, "spatial height must be >= 8"

    mean = jnp.asarray(pixel_mean, jnp.float32).reshape(-1)
    std = jnp.asarray(pixel_std, jnp.float32).reshape(-1)
    assert mean.shape == (C,) and std.shape == (C,)
    inv = 1.0 / std
    bias = -mean * inv
    # Packed per-plane constants: row r = (n, c) plane -> [1/std_c, -mean_c/std_c].
    const = jnp.tile(jnp.stack([inv, bias], axis=-1), (N, 1)).reshape(R, 1, 2)

    x3 = images.reshape(R, H, W)            # contiguous reshape: free

    # ---- byte-budgeted tile sizing (lane-dense: full-W rows) ----
    row_bytes = W * in_b + W_pad * out_b                      # one plane-row, in + out
    total_bytes = R * (H * W * in_b + H_pad * W_pad * out_b)
    budget = min(_TARGET_BLOCK_BYTES, max(total_bytes // _MIN_GRID_STEPS, 1))
    budget = max(budget, 8 * row_bytes)                       # at least a (1, 8, W) tile

    # Sublane alignment matching the input dtype packing.
    align = 32 if in_b == 1 else (16 if in_b == 2 else 8)
    th_cap = max(8, budget // row_bytes)
    th = _round_down(min(H, th_cap), align)
    if th < 8:
        th = _round_down(min(H, th_cap), 8)
    th = max(min(th, H), 8)

    tr = max(1, min(R, budget // (th * row_bytes)))

    grid = (pl.cdiv(R, tr), pl.cdiv(H_pad, th))
    h_in_max = pl.cdiv(H, th) - 1           # clamp for output rows in the pad region

    kernel = functools.partial(
        _normalize_pad_kernel,
        H=H, W=W, W_pad=W_pad, th=th, mask_rows=(H_pad > H))

    cost = pl.CostEstimate(
        flops=2 * R * H_pad * W_pad,
        transcendentals=0,
        bytes_accessed=total_bytes + R * 2 * 4,
    )

    out3 = pl.pallas_call(
        kernel,
        out_shape=jax.ShapeDtypeStruct((R, H_pad, W_pad), out_dtype),
        grid=grid,
        in_specs=[
            pl.BlockSpec((tr, th, W), lambda r, h: (r, jnp.minimum(h, h_in_max), 0)),
            pl.BlockSpec((tr, 1, 2), lambda r, h: (r, 0, 0)),
        ],
        out_specs=pl.BlockSpec((tr, th, W_pad), lambda r, h: (r, h, 0)),
        compiler_params=pltpu.CompilerParams(
            dimension_semantics=("parallel", "parallel"),
            vmem_limit_bytes=_VMEM_LIMIT_BYTES,
        ),
        cost_estimate=cost,
    )(x3, const)

    return out3.reshape(N, C, H_pad, W_pad)


def get_caffe2_inputs(images, size_divisibility=32, heights=None, widths=None):
    """Glue mirroring convert_batched_inputs_to_c2_format for same-sized CHW images.

    The ImageList zero-padding is fused into the normalize kernel downstream, so
    this only builds the Nx3 im_info tensor (height, width, scale).
    """
    # TODO(synk): ragged per-image sizes (ImageList.from_tensors) are host-side
    # data plumbing, not kernel compute; only the uniform-size path is here.
    N, C, H, W = images.shape
    if heights is None:
        heights = [H] * N
    if widths is None:
        widths = [W] * N
    del widths
    im_info = jnp.asarray(
        [[float(H), float(W), float(th) / float(H)] for th in heights],
        dtype=jnp.float32,
    )
    return images, im_info


def caffe2_preprocess_image(inputs, pixel_mean, pixel_std, *,
                            size_divisibility=32, out_dtype=None):
    """Mirror of Caffe2MetaArch._caffe2_preprocess_image (pad fused into the kernel)."""
    data, im_info = inputs
    normalized_data = caffe2_normalize_pad(
        data, pixel_mean, pixel_std,
        size_divisibility=size_divisibility, out_dtype=out_dtype)
    # ImageList(tensor=normalized_data, image_sizes=im_info)
    return normalized_data, im_info


if __name__ == "__main__":
    key = jax.random.PRNGKey(0)
    N, C, H, W = 2, 4, 16, 16
    size_div = 32   # pads 16x16 -> 32x32: exercises the fused bottom/right padding

    images = jax.random.uniform(key, (N, C, H, W), jnp.float32) * 255.0
    pixel_mean = jnp.linspace(100.0, 130.0, C, dtype=jnp.float32)
    pixel_std = jnp.linspace(1.0, 4.0, C, dtype=jnp.float32)

    c2_inputs = get_caffe2_inputs(images, size_divisibility=size_div)
    normalized, im_info = caffe2_preprocess_image(
        c2_inputs, pixel_mean, pixel_std, size_divisibility=size_div)
    normalized = jax.block_until_ready(normalized)

    # Reference: literal pad-then-normalize (detectron2/caffe2 semantics).
    pad_h, pad_w = (-H) % size_div, (-W) % size_div
    padded = jnp.pad(images, ((0, 0), (0, 0), (0, pad_h), (0, pad_w)))
    ref = (padded - pixel_mean[None, :, None, None]) / pixel_std[None, :, None, None]

    assert normalized.shape == (N, C, H + pad_h, W + pad_w)
    assert im_info.shape == (N, 3)
    # Reciprocal-multiply + fused bias vs true division differ by a few ulp.
    assert jnp.allclose(normalized, ref, atol=1e-4, rtol=1e-5)

    # No-padding path (size_divisibility divides H and W).
    normalized_np, _ = caffe2_preprocess_image(
        c2_inputs, pixel_mean, pixel_std, size_divisibility=8)
    normalized_np = jax.block_until_ready(normalized_np)
    ref_np = (images - pixel_mean[None, :, None, None]) / pixel_std[None, :, None, None]
    assert normalized_np.shape == images.shape
    assert jnp.allclose(normalized_np, ref_np, atol=1e-4, rtol=1e-5)

    # bf16-output path: cast fused on the store, arithmetic stays f32 in-kernel.
    normalized_bf16 = jax.block_until_ready(
        caffe2_normalize_pad(images, pixel_mean, pixel_std,
                             size_divisibility=size_div, out_dtype=jnp.bfloat16))
    assert normalized_bf16.dtype == jnp.bfloat16
    assert jnp.allclose(normalized_bf16.astype(jnp.float32), ref, atol=0.5, rtol=2e-2)

    print("KERNEL_OK")
</pallas_src>

<mosaic_0001>
module attributes {stable_mosaic.version = 11 : i64} {
  func.func @_normalize_pad_kernel(%arg0: i32, %arg1: i32, %arg2: memref<1x16x16xf32, #tpu.memory_space<vmem>>, %arg3: memref<1x1x2xf32, #tpu.memory_space<vmem>>, %arg4: memref<1x16x32xf32, #tpu.memory_space<vmem>>) attributes {dimension_semantics = [#tpu.dimension_semantics<parallel>, #tpu.dimension_semantics<parallel>], iteration_bounds = array<i64: 8, 2>, scalar_prefetch = 0 : i64, scratch_operands = 0 : i64, tpu.core_type = #tpu.core_type<tc>, window_params = [{transform_indices = @transform_0, window_bounds = array<i64: 1, 16, 16>}, {transform_indices = @transform_1, window_bounds = array<i64: 1, 1, 2>}, {transform_indices = @transform_2, window_bounds = array<i64: 1, 16, 32>}]} {
    %c0 = arith.constant 0 : index
    %c0_0 = arith.constant 0 : index
    %c0_1 = arith.constant 0 : index
    %0 = vector.load %arg3[%c0, %c0_0, %c0_1] : memref<1x1x2xf32, #tpu.memory_space<vmem>>, vector<1x1x2xf32>
    %1 = vector.extract_strided_slice %0 {offsets = [0, 0, 0], sizes = [1, 1, 1], strides = [1, 1, 1]} : vector<1x1x2xf32> to vector<1x1x1xf32>
    %2 = vector.extract_strided_slice %0 {offsets = [0, 0, 1], sizes = [1, 1, 1], strides = [1, 1, 1]} : vector<1x1x2xf32> to vector<1x1x1xf32>
    %c0_2 = arith.constant 0 : index
    %c0_3 = arith.constant 0 : index
    %c0_4 = arith.constant 0 : index
    %3 = vector.load %arg2[%c0_2, %c0_3, %c0_4] : memref<1x16x16xf32, #tpu.memory_space<vmem>>, vector<1x16x16xf32>
    %4 = vector.broadcast %1 : vector<1x1x1xf32> to vector<1x16x16xf32>
    %5 = arith.mulf %3, %4 : vector<1x16x16xf32>
    %6 = vector.broadcast %2 : vector<1x1x1xf32> to vector<1x16x16xf32>
    %7 = arith.addf %5, %6 : vector<1x16x16xf32>
    %c16_i32 = arith.constant 16 : i32
    %8 = arith.muli %arg1, %c16_i32 : i32
    %9 = tpu.iota {dimensions = array<i32: 1>} : vector<1x16x16xi32>
    %10 = vector.broadcast %8 : i32 to vector<1x16x16xi32>
    %11 = arith.addi %10, %9 : vector<1x16x16xi32>
    %c16_i32_5 = arith.constant 16 : i32
    %12 = vector.broadcast %c16_i32_5 : i32 to vector<1x16x16xi32>
    %13 = arith.cmpi slt, %11, %12 : vector<1x16x16xi32>
    %14 = vector.shape_cast %2 : vector<1x1x1xf32> to vector<1x1x1xf32>
    %15 = vector.broadcast %14 : vector<1x1x1xf32> to vector<1x16x16xf32>
    %16 = arith.select %13, %7, %15 : vector<1x16x16xi1>, vector<1x16x16xf32>
    %c0_6 = arith.constant 0 : index
    %c0_7 = arith.constant 0 : index
    %c0_8 = arith.constant 0 : index
    %17 = vector.load %arg4[%c0_6, %c0_7, %c0_8] : memref<1x16x32xf32, #tpu.memory_space<vmem>>, vector<1x16x16xf32>
    tpu.vector_store %arg4[%c0_6, %c0_7, %c0_8], %16 {strides = array<i32>} : memref<1x16x32xf32, #tpu.memory_space<vmem>>, vector<1x16x16xf32>,
    %18 = vector.shape_cast %2 : vector<1x1x1xf32> to vector<1x1x1xf32>
    %19 = vector.broadcast %18 : vector<1x1x1xf32> to vector<1x16x16xf32>
    %c0_9 = arith.constant 0 : index
    %c0_10 = arith.constant 0 : index
    %c16 = arith.constant 16 : index
    %20 = vector.load %arg4[%c0_9, %c0_10, %c16] : memref<1x16x32xf32, #tpu.memory_space<vmem>>, vector<1x16x16xf32>
    tpu.vector_store %arg4[%c0_9, %c0_10, %c16], %19 {strides = array<i32>} : memref<1x16x32xf32, #tpu.memory_space<vmem>>, vector<1x16x16xf32>,
    return
  }
  func.func @transform_0(%arg0: i32, %arg1: i32) -> (i32, i32, i32) {
    %c0_i32 = arith.constant 0 : i32
    %0 = arith.minsi %arg1, %c0_i32 : i32
    %c0_i32_0 = arith.constant 0 : i32
    %c0_i32_1 = arith.constant 0 : i32
    return %arg0, %0, %c0_i32_0 : i32, i32, i32
  }
  func.func @transform_1(%arg0: i32, %arg1: i32) -> (i32, i32, i32) {
    %c0_i32 = arith.constant 0 : i32
    %c0_i32_0 = arith.constant 0 : i32
    %c0_i32_1 = arith.constant 0 : i32
    return %arg0, %c0_i32, %c0_i32_0 : i32, i32, i32
  }
  func.func @transform_2(%arg0: i32, %arg1: i32) -> (i32, i32, i32) {
    %c0_i32 = arith.constant 0 : i32
    %c0_i32_0 = arith.constant 0 : i32
    return %arg0, %arg1, %c0_i32 : i32, i32, i32
  }
}

</mosaic_0001>

<llo_original>
// kernel: tpu_custom_call.1
$region0: #{tpu_custom_call.1}
  #allocation0 [shape = 'u32[]', space=smem, size = 0x4, offset = 0x4, fixed_abs, tag = 'smem constant byte address 0x4 - core index']
  #allocation1 [shape = 'u32[144,128]{1,0:T(1,128)}', space=vmem, size = 0x12000, scoped, tag = 'internal scratch']
  %s0 = inlined_call_operand.hbm [shape: f32[8,16,16], index: 0, kind: input, shape index: {}]
  %s1 = inlined_call_operand.vmem [shape: f32[8,1,2], index: 1, kind: input, shape index: {}]
  %s2 = inlined_call_operand.hbm [shape: f32[8,32,32], index: 2, kind: output, shape index: {}]
  %s3 = sld [smem:[#allocation0]]
  $region45: #{tpu_custom_call.1} parent=0
    _
  %s5 = ssub.s32 1, %s3
  %s6 = scalar_select 0, %s5, %s3
  $region1: #{tpu_custom_call.1} parent=0
    #allocation2 [shape = 'u8[16384]{0}', space=vmem, size = 0x4000, scoped, tag = 'input window, operand 0']
    #allocation3 [shape = 's32[2]{0}', space=sflag, size = 0x8, scoped, tag = 'scoped memory for tpu_custom_call.1']
    #allocation4 [shape = 's32[2]{0}', space=sflag, size = 0x8, scoped, tag = 'scoped memory for tpu_custom_call.1']
    #allocation5 [shape = 'u8[16384]{0}', space=vmem, size = 0x4000, scoped, tag = 'output window, operand 0']
    %7 = vsyncpa [#allocation3], 0
    %s8 = scalar_lea.sflag [#allocation3], 1
    %9 = vsyncpa %s8, 0
    %10 = vsyncpa [#allocation4], 0
    %s11 = scalar_lea.sflag [#allocation4], 1
    %12 = vsyncpa %s11, 0
    loop: start=0, step=1, limit=18
    $region2: #{tpu_custom_call.1} parent=1 // loop_pre_header
      _
    $region3: #{tpu_custom_call.1} parent=1 // loop_header
      %s14 = sphi 0, %s18
      %p15 = scmp.ge.s32.totalorder %s14, 18
      %s21 = sphi 0, %s33
      %s22 = sphi 0, %s29
      %s23 = sphi 0, %s21
      %s24 = sphi 0, %s22
      %s25 = sphi 0, %s23
      %s26 = sphi 0, %s24
      %s42 = sphi 0, %s44
      %s45 = sphi 0, %s42
      %s46 = sphi 0, %s45
      %s62 = sphi 0, %s46
      %s68 = sphi 0, %s70
      %s71 = sphi 0, %s68
      %s72 = sphi 0, %s71
      %s88 = sphi 0, %s72
      %s96 = sphi 0, %s98
      %s99 = sphi 0, %s96
      %s100 = sphi 0, %s99
      %s116 = sphi 0, %s100
    $region4: #{tpu_custom_call.1} parent=1 // loop_header_branch
      %17 = sbr.rel (%p15) target = $region8
    $region5: #{tpu_custom_call.1} parent=1 // loop_body
      %s19 = ssub.s32 %s14, 1
      %s20 = ssub.s32 %s14, 2
      %s27 = sadd.s32 1, %s22
      %p28 = scmp.ge.s32.totalorder %s27, 2
      %s29 = scalar_select %p28, 0, %s27
      %s30 = sadd.s32 1, %s21
      %s31 = scalar_select %p28, %s30, %s21
      %p32 = scmp.ge.s32.totalorder %s31, 8
      %s33 = scalar_select %p32, 0, %s31
      %p34 = scmp.lt.s32.totalorder %s22, 0
      %s35 = scalar_select %p34, %s22, 0
      %p36 = scmp.lt.s32.totalorder %s29, 0
      %s37 = scalar_select %p36, %s29, 0
      %s38 = ssub.s32 %s21, %s33
      %s39 = ssub.s32 %s35, %s37
      %s40 = sor.u32 %s38, %s39
      %p41 = scmp.eq.s32.totalorder %s40, 0
      %s43 = sadd.s32 %s42, 1
      %s44 = scalar_select %p41, %s42, %s43
      %p47 = pneg %p41
      %p48 = scmp.eq.s32.totalorder %s14, 15
      %p49 = por %p47, %p48
      %p50 = scmp.ne.s32.totalorder %s42, %s45
      %p51 = scmp.eq.s32.totalorder %s14, 0
      %p52 = por %p50, %p51
      %p53 = scmp.ne.s32.totalorder %s42, %s45
      %p54 = scmp.eq.s32.totalorder %s19, 15
      %p55 = por %p53, %p54
      %p56 = scmp.ne.s32.totalorder %s45, %s46
      %p57 = scmp.eq.s32.totalorder %s19, 0
      %p58 = por %p56, %p57
      %p59 = scmp.ne.s32.totalorder %s45, %s46
      %p60 = scmp.eq.s32.totalorder %s20, 15
      %p61 = por %p59, %p60
      %p63 = scmp.ne.s32.totalorder %s46, %s62
      %p64 = scmp.eq.s32.totalorder %s20, 0
      %p65 = por %p63, %p64
      %s66 = ssub.s32 %s21, %s33
      %p67 = scmp.eq.s32.totalorder %s66, 0
      %s69 = sadd.s32 %s68, 1
      %s70 = scalar_select %p67, %s68, %s69
      %p73 = pneg %p67
      %p74 = scmp.eq.s32.totalorder %s14, 15
      %p75 = por %p73, %p74
      %p76 = scmp.ne.s32.totalorder %s68, %s71
      %p77 = scmp.eq.s32.totalorder %s14, 0
      %p78 = por %p76, %p77
      %p79 = scmp.ne.s32.totalorder %s68, %s71
      %p80 = scmp.eq.s32.totalorder %s19, 15
      %p81 = por %p79, %p80
      %p82 = scmp.ne.s32.totalorder %s71, %s72
      %p83 = scmp.eq.s32.totalorder %s19, 0
      %p84 = por %p82, %p83
      %p85 = scmp.ne.s32.totalorder %s71, %s72
      %p86 = scmp.eq.s32.totalorder %s20, 15
      %p87 = por %p85, %p86
      %p89 = scmp.ne.s32.totalorder %s72, %s88
      %p90 = scmp.eq.s32.totalorder %s20, 0
      %p91 = por %p89, %p90
      %s92 = ssub.s32 %s21, %s33
      %s93 = ssub.s32 %s22, %s29
      %s94 = sor.u32 %s92, %s93
      %p95 = scmp.eq.s32.totalorder %s94, 0
      %s97 = sadd.s32 %s96, 1
      %s98 = scalar_select %p95, %s96, %s97
      %p101 = pneg %p95
      %p102 = scmp.eq.s32.totalorder %s14, 15
      %p103 = por %p101, %p102
      %p104 = scmp.ne.s32.totalorder %s96, %s99
      %p105 = scmp.eq.s32.totalorder %s14, 0
      %p106 = por %p104, %p105
      %p107 = scmp.ne.s32.totalorder %s96, %s99
      %p108 = scmp.eq.s32.totalorder %s19, 15
      %p109 = por %p107, %p108
      %p110 = scmp.ne.s32.totalorder %s99, %s100
      %p111 = scmp.eq.s32.totalorder %s19, 0
      %p112 = por %p110, %p111
      %p113 = scmp.ne.s32.totalorder %s99, %s100
      %p114 = scmp.eq.s32.totalorder %s20, 15
      %p115 = por %p113, %p114
      %p117 = scmp.ne.s32.totalorder %s100, %s116
      %p118 = scmp.eq.s32.totalorder %s20, 0
      %p119 = por %p117, %p118
      %p120 = scmp.le.s32.totalorder 1, %s14
      %p121 = scmp.lt.s32.totalorder %s14, 17
      %p122 = pnand %p120, %p121
      %p123 = pneg %p122
      // Predicated region
      $region9: #{tpu_custom_call.1} parent=5 // pred_check
        _
      $region10: #{tpu_custom_call.1} parent=5 // pred_check_branch
        %125 = sbr.rel (%p122) target = $region12
      $region11: #{tpu_custom_call.1} parent=5 // pred_region
        %s126 = ssub.s32 %s14, 1
      $region12: #{tpu_custom_call.1} parent=5 // pred_fallthru
        _
      %p127 = scmp.lt.s32.totalorder %s14, 16
      // Predicated region
      $region13: #{tpu_custom_call.1} parent=5 // pred_check
        %p128 = pneg %p127
      $region14: #{tpu_custom_call.1} parent=5 // pred_check_branch
        %130 = sbr.rel (%p128) target = $region16
      $region15: #{tpu_custom_call.1} parent=5 // pred_region
        // Predicated region
        $region17: #{tpu_custom_call.1} parent=15 // pred_check
          %p131 = pneg %p52
        $region18: #{tpu_custom_call.1} parent=15 // pred_check_branch
          %133 = sbr.rel (%p131) target = $region20
        $region19: #{tpu_custom_call.1} parent=15 // pred_region
          %s134 = sand.u32 %s42, 1
          %s135 = scalar_lea.sflag [#allocation3], %s134
          %s136 = sand.u32 %s42, 1
          %s137 = smul.addr %s136, 16
          %s138 = scalar_lea.vmem [#allocation2], %s137
          %p139 = scmp.lt.s32.totalorder %s22, 0
          %s140 = scalar_select %p139, %s22, 0
          %s141 = smul.u32 2, %s140
          %s143 = ssub.s32 256, 256
          %144 = vsyncadd %s135, %s143
          %s145 = smul.addr %s21, 2
          %s146 = sadd.s32 %s141, %s145
          %s147 = smul.addr %s146, 128
          %s148 = scalar_lea.hbm %s0, %s147
          %s149 = sshll.u32 %s138, 4
          %s150 = int_to_ptr.vmem [resolvable:$true] %s149
          %155 = dma.hbm_to_vmem [thread:$0]  %s148, 256, %s150, %s135, 128, 128, 8
        $region20: #{tpu_custom_call.1} parent=15 // pred_fallthru
          _
        // Predicated region
        $region21: #{tpu_custom_call.1} parent=15 // pred_check
          %p156 = pneg %p78
        $region22: #{tpu_custom_call.1} parent=15 // pred_check_branch
          %158 = sbr.rel (%p156) target = $region24
        $region23: #{tpu_custom_call.1} parent=15 // pred_region
          %p159 = scmp.lt.s32.totalorder %s21, 7
          %s160 = scalar_select %p159, %s21, 7
          %s161 = scalar_lea.vmem %s1, %s160
        $region24: #{tpu_custom_call.1} parent=15 // pred_fallthru
          _
      $region16: #{tpu_custom_call.1} parent=5 // pred_fallthru
        _
      %p162 = scmp.le.s32.totalorder 1, %s14
      %p163 = scmp.lt.s32.totalorder %s14, 17
      %p164 = pnand %p162, %p163
      %p165 = pneg %p164
      // Predicated region
      $region25: #{tpu_custom_call.1} parent=5 // pred_check
        _
      $region26: #{tpu_custom_call.1} parent=5 // pred_check_branch
        %167 = sbr.rel (%p164) target = $region28
      $region27: #{tpu_custom_call.1} parent=5 // pred_region
        %s168 = ssub.s32 %s14, 1
        %s169 = sand.u32 %s45, 1
        %s170 = scalar_lea.sflag [#allocation3], %s169
        %s171 = sand.u32 %s45, 1
        %s172 = smul.addr %s171, 16
        %s173 = scalar_lea.vmem [#allocation2], %s172
        // Predicated region
        $region29: #{tpu_custom_call.1} parent=27 // pred_check
          %p174 = pneg %p58
        $region30: #{tpu_custom_call.1} parent=27 // pred_check_branch
          %176 = sbr.rel (%p174) target = $region32
        $region31: #{tpu_custom_call.1} parent=27 // pred_region
          %177 = dma.done %s170, 256
        $region32: #{tpu_custom_call.1} parent=27 // pred_fallthru
          _
        %s178 = sand.u32 %s45, 1
        %s179 = scalar_lea.sflag [#allocation3], %s178
        %s180 = sand.u32 %s45, 1
        %s181 = smul.addr %s180, 16
        %s182 = scalar_lea.vmem [#allocation2], %s181
        %p183 = pneg %p58
        %p184 = pneg %p55
        %p185 = scmp.lt.s32.totalorder %s23, 7
        %s186 = scalar_select %p185, %s23, 7
        %s187 = scalar_lea.vmem %s1, %s186
        %p188 = pneg %p84
        %p189 = pneg %p81
        %p190 = pneg %p112
        %p191 = pneg %p109
        %s192 = sand.u32 %s99, 1
        %s193 = scalar_lea.sflag [#allocation4], %s192
        %s194 = sand.u32 %s99, 1
        %s195 = smul.addr %s194, 16
        %s196 = scalar_lea.vmem [#allocation5], %s195
        %p197 = scmp.lt.s32.totalorder %s24, 0
        %s198 = scalar_select %p197, %s24, 0
        %s199 = smul.u32 2, %s198
        %p200 = scmp.lt.s32.totalorder %s23, 7
        %s201 = scalar_select %p200, %s23, 7
        %s202 = scalar_lea.vmem %s1, %s201
        %s203 = smul.u32 2, %s24
        %v204 = vld [vmem:[%s202] sm:$0x1]
        %v205 = vld [vmem:[%s173] sm:$0xff]
        %v206 = vld [vmem:[%s173 + $0x8] sm:$0xff]
        %v208 = vlaneseq
        %v209 = vshrl.u32 %v208, 7
        %v210 = vsub.s32 0, %v209
        %v211 = vrot.slane %v204, %v210
        %212 = vset.pattern.permute.xlu0 0
        %213 = vperm.xlu0 %212, %v211
        %v214 = vpop.permute.xlu0 %213
        %v216 = vmul.f32 %v205, %v214
        %v217 = vmul.f32 %v206, %v214
        %218 = vset.pattern.permute.xlu0 1
        %219 = vperm.xlu0 %218, %v211
        %v220 = vpop.permute.xlu0 %219
        %v222 = vadd.f32 %v216, %v220
        %v223 = vadd.f32 %v217, %v220
        %s224 = smul.u32 %s24, 16
        %v225 = vlaneseq
        %v226 = vshrl.u32 %v225, 7
        %v227 = vadd.s32 %v226, 8
        %v228 = vstv %s224
        %v229 = vadd.s32 %v228, %v226
        %v230 = vadd.s32 %v228, %v227
        %vm231 = vcmp.lt.s32.totalorder %v229, 16
        %vm232 = vcmp.lt.s32.totalorder %v230, 16
        %v233 = vsel %vm231, %v222, %v220
        %v234 = vsel %vm232, %v223, %v220
        %vm235 = vcmask 130048
        %236 = vst.msk [vmem:[%s196] sm:$0xff] %vm235, %v233
        %237 = vst.msk [vmem:[%s196 + $0x8] sm:$0xff] %vm235, %v234
        %vm238 = vcmask 261248
        %239 = vst.msk [vmem:[%s196] sm:$0xff] %vm238, %v220
        %240 = vst.msk [vmem:[%s196 + $0x8] sm:$0xff] %vm238, %v220
        %s241 = sand.u32 %s99, 1
        %s242 = scalar_lea.sflag [#allocation4], %s241
        %s243 = sand.u32 %s99, 1
        %s244 = smul.addr %s243, 16
        %s245 = scalar_lea.vmem [#allocation5], %s244
        // Predicated region
        $region33: #{tpu_custom_call.1} parent=27 // pred_check
          %p246 = pneg %p109
        $region34: #{tpu_custom_call.1} parent=27 // pred_check_branch
          %248 = sbr.rel (%p246) target = $region36
        $region35: #{tpu_custom_call.1} parent=27 // pred_region
          %s249 = smul.u32 2, %s24
          %s251 = ssub.s32 256, 256
          %252 = vsyncadd %s242, %s251
          %s253 = smul.addr %s23, 4
          %s254 = sadd.s32 %s249, %s253
          %s255 = smul.addr %s254, 128
          %s256 = scalar_lea.hbm %s2, %s255
          %s257 = sshll.u32 %s245, 4
          %s258 = int_to_ptr.vmem [resolvable:$true] %s257
          %263 = dma.vmem_to_hbm [thread:$0]  %s258, 256, %s256, %s242, 128, 128, 8
        $region36: #{tpu_custom_call.1} parent=27 // pred_fallthru
          _
      $region28: #{tpu_custom_call.1} parent=5 // pred_fallthru
        _
      %p264 = scmp.le.s32.totalorder 2, %s14
      // Predicated region
      $region37: #{tpu_custom_call.1} parent=5 // pred_check
        %p265 = pneg %p264
      $region38: #{tpu_custom_call.1} parent=5 // pred_check_branch
        %267 = sbr.rel (%p265) target = $region40
      $region39: #{tpu_custom_call.1} parent=5 // pred_region
        %s268 = ssub.s32 %s14, 2
        // Predicated region
        $region41: #{tpu_custom_call.1} parent=39 // pred_check
          %p269 = pneg %p115
        $region42: #{tpu_custom_call.1} parent=39 // pred_check_branch
          %271 = sbr.rel (%p269) target = $region44
        $region43: #{tpu_custom_call.1} parent=39 // pred_region
          %s272 = sand.u32 %s100, 1
          %s273 = scalar_lea.sflag [#allocation4], %s272
          %s274 = sand.u32 %s100, 1
          %s275 = smul.addr %s274, 16
          %s276 = scalar_lea.vmem [#allocation5], %s275
          %277 = dma.done %s273, 256
        $region44: #{tpu_custom_call.1} parent=39 // pred_fallthru
          _
      $region40: #{tpu_custom_call.1} parent=5 // pred_fallthru
        _
    $region6: #{tpu_custom_call.1} parent=1 // loop_footer
      %s18 = sadd.s32 1, %s14
    $region7: #{tpu_custom_call.1} parent=1 // loop_footer_branch
      %13 = sbr.rel target = $region3
    $region8: #{tpu_custom_call.1} parent=1 // loop_exit
      _
    %278 = vsyncpa [#allocation3], 1
    %s279 = scalar_lea.sflag [#allocation3], 1
    %280 = vsyncpa %s279, 1
    %281 = vsyncpa [#allocation4], 1
    %s282 = scalar_lea.sflag [#allocation4], 1
    %283 = vsyncpa %s282, 1

</llo_original>
